<compile_context>
chip_gen: v7x
topology: tpu7x:2x2x1
jax: 0.10.0
libtpu: 0.0.40
codegen_flags: <defaults>
</compile_context>

<pallas_src>
import jax
import jax.numpy as jnp
import numpy as np
from jax.experimental import pallas as pl
from jax.experimental.pallas import tpu as pltpu

_LANE = 128
# sublane packing quantum per element size (bytes): f32 -> 8, bf16 -> 16, int8/fp8 -> 32
_SUBLANE_PACK = {4: 8, 2: 16, 1: 32}
_MAX_TILE_BYTES = 16 * 1024 * 1024   # per-buffer ceiling (v5e/v6e regime)
_MIN_TILE_BYTES = 2 * 1024 * 1024


# ----------------------------------------------------------------------------
# Path 1: zero-copy identity (output aliases input, no data movement).
# ----------------------------------------------------------------------------
def _alias_noop_kernel(x_ref, o_ref):
    del x_ref
    # Output buffer is aliased to the input: the bytes are already correct.
    # Only pin the dependency so the aliased output is considered produced.
    pltpu.touch(o_ref)


def _identity_zero_copy(x):
    return pl.pallas_call(
        _alias_noop_kernel,
        out_shape=jax.ShapeDtypeStruct(x.shape, x.dtype),
        in_specs=[pl.BlockSpec(memory_space=pl.ANY)],
        out_specs=pl.BlockSpec(memory_space=pl.ANY),
        input_output_aliases={0: 0},
        compiler_params=pltpu.CompilerParams(has_side_effects=True),
    )(x)


_ZERO_COPY_STATE = {"checked": False, "ok": False}


def _zero_copy_available():
    """One-time probe: use the zero-copy path only if it compiles AND is exact."""
    st = _ZERO_COPY_STATE
    if not st["checked"]:
        st["checked"] = True
        try:
            probe = jnp.arange(8 * _LANE, dtype=jnp.float32).reshape(8, _LANE)
            expected = np.asarray(probe)
            got = np.asarray(jax.block_until_ready(_identity_zero_copy(probe)))
            st["ok"] = got.shape == expected.shape and np.array_equal(got, expected)
        except Exception:
            st["ok"] = False
    return st["ok"]


# ----------------------------------------------------------------------------
# Path 2: materialized copy through VMEM (hardened tiling).
# ----------------------------------------------------------------------------
def _copy_kernel(x_ref, o_ref):
    o_ref[...] = x_ref[...]


def _vmem_capacity_bytes():
    """Physical VMEM per core; conservative default (v7x = 64 MiB) on failure."""
    try:
        cap = int(pltpu.get_tpu_info().vmem_capacity_bytes)
        if cap > 0:
            return cap
    except Exception:
        pass
    return 64 * 1024 * 1024


def _largest_lane_divisor(total, max_cols=4096):
    """Largest multiple-of-128 divisor of `total`, capped at `max_cols`."""
    c = (min(max_cols, total) // _LANE) * _LANE
    while c >= _LANE:
        if total % c == 0:
            return c
        c -= _LANE
    return _LANE


def _choose_tiles(rows, cols, itemsize, per_tile_cap, pack):
    # Column tile: full cols if a pack-row strip fits the cap, else a
    # 128-multiple chunk (prevents the wide-last-dim VMEM blowup).
    if cols * pack * itemsize <= per_tile_cap:
        tile_c = cols
    else:
        tile_c = max(_LANE, (per_tile_cap // (pack * itemsize * _LANE)) * _LANE)
    # Row tile: as many pack-aligned rows as fit the per-buffer byte cap.
    max_r = max(1, per_tile_cap // (tile_c * itemsize))
    if max_r >= rows:
        tile_r = rows
    else:
        tile_r = max(pack, (max_r // pack) * pack)
    # Guarantee >= 2 grid steps when feasible so dimension_semantics
    # ("parallel", ...) actually shards the copy across both v7x TensorCores.
    if tile_r >= rows and tile_c >= cols and rows >= 2 * pack:
        half = (rows + 1) // 2
        tile_r = max(pack, ((half + pack - 1) // pack) * pack)
    return tile_r, tile_c


def _identity_copy(x):
    orig_shape = x.shape
    itemsize = jnp.dtype(x.dtype).itemsize
    total = 1
    for d in orig_shape:
        total *= int(d)
    if total == 0:
        return x

    pack = _SUBLANE_PACK.get(itemsize, 8)

    cap = _vmem_capacity_bytes()
    budget = (3 * cap) // 4                       # scoped-VMEM headroom
    per_tile_cap = max(_MIN_TILE_BYTES, min(_MAX_TILE_BYTES, budget // 4))

    pad = 0
    if len(orig_shape) >= 2 and (orig_shape[-1] * orig_shape[-2]) % _LANE == 0:
        # e.g. NCHW with H*W a multiple of 128: (N*C, H*W) lane-dense slab.
        cols = int(orig_shape[-1] * orig_shape[-2])
        rows = total // cols
        x2d = x.reshape(rows, cols)
    elif total % _LANE == 0:
        cols = _largest_lane_divisor(total)
        rows = total // cols
        x2d = x.reshape(rows, cols)
    else:
        # Pad to a pack*128 quantum: restores lane-dense unmasked stores and
        # pipelining instead of a single masked whole-array block.
        quantum = pack * _LANE
        padded = ((total + quantum - 1) // quantum) * quantum
        pad = padded - total
        flat = jnp.pad(x.reshape(-1), (0, pad))
        cols = _LANE
        rows = padded // _LANE
        x2d = flat.reshape(rows, cols)

    tile_r, tile_c = _choose_tiles(rows, cols, itemsize, per_tile_cap, pack)
    grid = (pl.cdiv(rows, tile_r), pl.cdiv(cols, tile_c))

    out2d = pl.pallas_call(
        _copy_kernel,
        out_shape=jax.ShapeDtypeStruct((rows, cols), x.dtype),
        grid=grid,
        in_specs=[pl.BlockSpec((tile_r, tile_c), lambda i, j: (i, j))],
        out_specs=pl.BlockSpec((tile_r, tile_c), lambda i, j: (i, j)),
        compiler_params=pltpu.CompilerParams(
            dimension_semantics=("parallel", "parallel"),
            vmem_limit_bytes=int(budget),
        ),
    )(x2d)

    if pad:
        return out2d.reshape(-1)[:total].reshape(orig_shape)
    return out2d.reshape(orig_shape)


# ----------------------------------------------------------------------------
# Public forward.
# ----------------------------------------------------------------------------
def base_model_forward(x):
    """Identity forward pass of BaseModel through a Pallas TPU kernel."""
    if _zero_copy_available():
        return _identity_zero_copy(x)
    return _identity_copy(x)


if __name__ == "__main__":
    key = jax.random.PRNGKey(0)
    # Small NCHW input consistent with a conv-style model: batch=2, channels=4,
    # spatial 16x16 -> lane-dense (8, 256) slab on the copy path.
    x = jax.random.normal(key, (2, 4, 16, 16), dtype=jnp.float32)
    x_host = np.asarray(x)  # host copy taken BEFORE any aliasing call

    # Primary path (zero-copy if available, else the materialized copy).
    y = jax.block_until_ready(base_model_forward(x))
    assert y.shape == x.shape and y.dtype == x.dtype
    assert np.array_equal(np.asarray(y), x_host), "identity forward mismatch"

    # Also exercise the hardened materialized-copy kernel explicitly.
    y2 = jax.block_until_ready(_identity_copy(x))
    assert np.array_equal(np.asarray(y2), x_host), "copy-kernel mismatch"

    # Non-128-divisible total exercises the pad-to-lane fallback.
    z = jax.random.normal(jax.random.PRNGKey(1), (3, 5, 7), dtype=jnp.float32)
    z_host = np.asarray(z)
    w = jax.block_until_ready(_identity_copy(z))
    assert w.shape == z.shape and np.array_equal(np.asarray(w), z_host), "padded-copy mismatch"

    print("KERNEL_OK")
</pallas_src>

<mosaic_0001>
module attributes {stable_mosaic.version = 11 : i64} {
  func.func @_alias_noop_kernel(%arg0: memref<8x128xf32, #tpu.memory_space<any>>, %arg1: memref<8x128xf32, #tpu.memory_space<any>>) attributes {dimension_semantics = [], scalar_prefetch = 0 : i64, scratch_operands = 0 : i64, tpu.core_type = #tpu.core_type<tc>} {
    return
  }
}

module attributes {stable_mosaic.version = 11 : i64} {
  func.func @_copy_kernel(%arg0: i32, %arg1: i32, %arg2: memref<8x256xf32, #tpu.memory_space<vmem>>, %arg3: memref<8x256xf32, #tpu.memory_space<vmem>>) attributes {dimension_semantics = [#tpu.dimension_semantics<parallel>, #tpu.dimension_semantics<parallel>], iteration_bounds = array<i64: 1, 1>, scalar_prefetch = 0 : i64, scratch_operands = 0 : i64, tpu.core_type = #tpu.core_type<tc>, window_params = [{transform_indices = @transform_0, window_bounds = array<i64: 8, 256>}, {transform_indices = @transform_1, window_bounds = array<i64: 8, 256>}]} {
    %c0 = arith.constant 0 : index
    %c0_0 = arith.constant 0 : index
    %0 = vector.load %arg2[%c0, %c0_0] : memref<8x256xf32, #tpu.memory_space<vmem>>, vector<8x256xf32>
    %c0_1 = arith.constant 0 : index
    %c0_2 = arith.constant 0 : index
    %1 = vector.load %arg3[%c0_1, %c0_2] : memref<8x256xf32, #tpu.memory_space<vmem>>, vector<8x256xf32>
    tpu.vector_store %arg3[%c0_1, %c0_2], %0 {strides = array<i32>} : memref<8x256xf32, #tpu.memory_space<vmem>>, vector<8x256xf32>,
    return
  }
  func.func @transform_0(%arg0: i32, %arg1: i32) -> (i32, i32) {
    %c0_i32 = arith.constant 0 : i32
    return %arg0, %arg1 : i32, i32
  }
  func.func @transform_1(%arg0: i32, %arg1: i32) -> (i32, i32) {
    %c0_i32 = arith.constant 0 : i32
    return %arg0, %arg1 : i32, i32
  }
}

</mosaic_0001>

<llo_original>
// kernel: tpu_custom_call.1
$region0: #{tpu_custom_call.1}
  #allocation0 [shape = 'u32[]', space=smem, size = 0x4, offset = 0x4, fixed_abs, tag = 'smem constant byte address 0x4 - core index']
  #allocation1 [shape = 'u32[144,128]{1,0:T(1,128)}', space=vmem, size = 0x12000, scoped, tag = 'internal scratch']
  %s0 = inlined_call_operand.hbm [shape: f32[8,128], index: 0, kind: input, shape index: {}, may-alias: {0,1}]
  %s1 = inlined_call_operand.hbm [shape: f32[8,128], index: 1, kind: output, shape index: {}, may-alias: {0,1}]
  %s2 = sld [smem:[#allocation0]]
  $region2: #{tpu_custom_call.1} parent=0
    _
  %s4 = ssub.s32 1, %s2
  %s5 = scalar_select 0, %s4, %s2

// kernel: tpu_custom_call.1
$region0: #{tpu_custom_call.1}
  #allocation0 [shape = 'u32[]', space=smem, size = 0x4, offset = 0x4, fixed_abs, tag = 'smem constant byte address 0x4 - core index']
  #allocation1 [shape = 'u32[144,128]{1,0:T(1,128)}', space=vmem, size = 0x12000, scoped, tag = 'internal scratch']
  %s0 = inlined_call_operand.hbm [shape: f32[8,256], index: 0, kind: input, shape index: {}]
  %s1 = inlined_call_operand.hbm [shape: f32[8,256], index: 1, kind: output, shape index: {}]
  %s2 = sld [smem:[#allocation0]]
  $region18: #{tpu_custom_call.1} parent=0
    _
  %s4 = ssub.s32 1, %s2
  %s5 = scalar_select 0, %s4, %s2
  $region1: #{tpu_custom_call.1} parent=0
    #allocation2 [shape = 'u8[8192]{0}', space=vmem, size = 0x2000, scoped, tag = 'input window, operand 0, single buffered']
    #allocation3 [shape = 's32[1]{0}', space=sflag, size = 0x4, scoped, tag = 'scoped memory for tpu_custom_call.1']
    #allocation4 [shape = 's32[1]{0}', space=sflag, size = 0x4, scoped, tag = 'scoped memory for tpu_custom_call.1']
    #allocation5 [shape = 'u8[8192]{0}', space=vmem, size = 0x2000, scoped, tag = 'output window, operand 0, single buffered']
    %6 = vsyncpa [#allocation3], 0
    %7 = vsyncpa [#allocation4], 0
    // Predicated region
    $region2: #{tpu_custom_call.1} parent=1 // pred_check
      _
    $region3: #{tpu_custom_call.1} parent=1 // pred_check_branch
      %9 = sbr.rel (0) target = $region5
    $region4: #{tpu_custom_call.1} parent=1 // pred_region
      %s11 = ssub.s32 256, 256
      %12 = vsyncadd [#allocation3], %s11
      %s14 = sshll.u32 [#allocation2], 4
      %s15 = int_to_ptr.vmem [resolvable:$true] %s14
      %17 = dma.hbm_to_vmem [thread:$0]  %s0, 256, %s15, [#allocation3]
    $region5: #{tpu_custom_call.1} parent=1 // pred_fallthru
      _
    // Predicated region
    $region6: #{tpu_custom_call.1} parent=1 // pred_check
      _
    $region7: #{tpu_custom_call.1} parent=1 // pred_check_branch
      %19 = sbr.rel (0) target = $region9
    $region8: #{tpu_custom_call.1} parent=1 // pred_region
      %20 = dma.done [#allocation3], 256
    $region9: #{tpu_custom_call.1} parent=1 // pred_fallthru
      _
    %v21 = vld [vmem:[#allocation2] sm:$0xff]
    %v22 = vld [vmem:[#allocation2 + $0x8] sm:$0xff]
    %23 = vst [vmem:[#allocation5] sm:$0xff] %v21
    %24 = vst [vmem:[#allocation5 + $0x8] sm:$0xff] %v22
    // Predicated region
    $region10: #{tpu_custom_call.1} parent=1 // pred_check
      _
    $region11: #{tpu_custom_call.1} parent=1 // pred_check_branch
      %26 = sbr.rel (0) target = $region13
    $region12: #{tpu_custom_call.1} parent=1 // pred_region
      %s28 = ssub.s32 256, 256
      %29 = vsyncadd [#allocation4], %s28
      %s31 = sshll.u32 [#allocation5], 4
      %s32 = int_to_ptr.vmem [resolvable:$true] %s31
      %34 = dma.vmem_to_hbm [thread:$0]  %s32, 256, %s1, [#allocation4]
    $region13: #{tpu_custom_call.1} parent=1 // pred_fallthru
      _
    // Predicated region
    $region14: #{tpu_custom_call.1} parent=1 // pred_check
      _
    $region15: #{tpu_custom_call.1} parent=1 // pred_check_branch
      %36 = sbr.rel (0) target = $region17
    $region16: #{tpu_custom_call.1} parent=1 // pred_region
      %37 = dma.done [#allocation4], 256
    $region17: #{tpu_custom_call.1} parent=1 // pred_fallthru
      _
    %38 = vsyncpa [#allocation3], 1
    %39 = vsyncpa [#allocation4], 1

</llo_original>
